<compile_context>
chip_gen: v7x
topology: tpu7x:2x2x1
jax: 0.10.0
libtpu: 0.0.40
codegen_flags: <defaults>
</compile_context>

<pallas_src>
import functools

import jax
import jax.numpy as jnp
from jax.experimental import pallas as pl
from jax.experimental.pallas import tpu as pltpu

NEG_SLOPE = 0.2          # PyG GATv2Conv default negative_slope
_MASK = -1e30            # mask value for f32 logits


def _round_up(v, m):
    return (v + m - 1) // m * m


def build_adj(edge_index, n_total):
    """Dense adjacency: adj[i, j] = 1 iff edge j -> i (bf16 {0,1} is exact).

    Self loops are forced on the full (padded) diagonal so every softmax row
    (including padded rows) is well defined — matches PyG's
    remove_self_loops + add_self_loops for the real nodes.
    """
    src, dst = edge_index[0], edge_index[1]
    adj = jnp.zeros((n_total, n_total), jnp.bfloat16)
    adj = adj.at[dst, src].set(1.0)
    idx = jnp.arange(n_total)
    adj = adj.at[idx, idx].set(1.0)
    return adj


# ---------------------------------------------------------------------------
# projection kernel: h = x @ W + b   (run once per layer, outside the grid)
# ---------------------------------------------------------------------------
def _proj_kernel(x_ref, w_ref, b_ref, o_ref):
    o_ref[...] = (jnp.dot(x_ref[...], w_ref[...],
                          preferred_element_type=jnp.float32)
                  + b_ref[...]).astype(o_ref.dtype)


def _project(x, w, b, *, tile_m, mxu_dtype):
    n_pad, f = x.shape
    c = w.shape[1]
    # TODO(synk): single K block — fine for the modest in/hidden dims of this
    # encoder; a K-loop grid axis would be needed for very wide features.
    return pl.pallas_call(
        _proj_kernel,
        out_shape=jax.ShapeDtypeStruct((n_pad, c), jnp.float32),
        grid_spec=pltpu.PrefetchScalarGridSpec(
            num_scalar_prefetch=0,
            grid=(n_pad // tile_m,),
            in_specs=[
                pl.BlockSpec((tile_m, f), lambda i: (i, 0)),
                pl.BlockSpec((f, c), lambda i: (0, 0)),
                pl.BlockSpec((1, c), lambda i: (0, 0)),
            ],
            out_specs=pl.BlockSpec((tile_m, c), lambda i: (i, 0)),
        ),
        compiler_params=pltpu.CompilerParams(
            dimension_semantics=("parallel",)),
    )(x.astype(mxu_dtype), w.astype(mxu_dtype), b)


# ---------------------------------------------------------------------------
# attention kernel: grid = (target tiles i, source blocks j)
# ---------------------------------------------------------------------------
def _gatv2_attn_kernel(blk_ref, hr_ref, hlt_ref, hl_ref, adj_ref, att_ref,
                       bias_ref, out_ref, m_s, l_s, acc_s,
                       *, channels, neg_slope, apply_relu, mxu_dtype):
    i = pl.program_id(0)
    j = pl.program_id(1)

    @pl.when(j == 0)
    def _init():
        m_s[...] = jnp.full(m_s.shape, _MASK, dtype=m_s.dtype)
        l_s[...] = jnp.zeros_like(l_s)
        acc_s[...] = jnp.zeros_like(acc_s)

    # Skip adjacency blocks with no edges at all (block-sparse GAT graphs).
    @pl.when(blk_ref[i, j] > 0)
    def _update():
        hr = hr_ref[...]                         # (TM, C)  target projection
        hlt = hlt_ref[...]                       # (C, TN)  source proj, transposed
        mask = adj_ref[...] != 0                 # raw bf16 compare, no f32 cast

        # GATv2 logits at the real channel width: unrolled per-channel
        # (TM, TN) slabs — outer sum, leaky_relu as maximum, SMEM scalar att.
        logits = None
        for c in range(channels):
            s = hr[:, c:c + 1] + hlt[c:c + 1, :]          # (TM, TN)
            s = jnp.maximum(s, neg_slope * s)             # leaky_relu
            s = att_ref[c] * s
            logits = s if logits is None else logits + s
        logits = jnp.where(mask, logits, _MASK)

        # online (flash-style) masked softmax update
        m_prev = m_s[...]                                  # (TM, 1)
        m_new = jnp.maximum(m_prev, jnp.max(logits, axis=-1, keepdims=True))
        # masked entries are zeroed explicitly (no reliance on exp underflow)
        p = jnp.where(mask, jnp.exp(logits - m_new), 0.0)  # (TM, TN)
        rescale = jnp.exp(m_prev - m_new)
        l_s[...] = rescale * l_s[...] + jnp.sum(p, axis=-1, keepdims=True)
        acc_s[...] = (rescale * acc_s[...]
                      + jnp.dot(p.astype(mxu_dtype),
                                hl_ref[...].astype(mxu_dtype),
                                preferred_element_type=jnp.float32))
        m_s[...] = m_new

    @pl.when(j == pl.num_programs(1) - 1)
    def _finalize():
        out = acc_s[...] / l_s[...] + bias_ref[...]        # exact normalizer
        if apply_relu:
            out = jnp.maximum(out, 0.0)
        out_ref[...] = out.astype(out_ref.dtype)


def _gatv2_layer(x_node, adj, blk, wl, bl, wr, br, att, bias, *,
                 apply_relu, tile_m, tile_n, mxu_dtype):
    n_pad = x_node.shape[0]
    c = wl.shape[1]

    # projections hoisted out of the attention grid (computed once per layer)
    h_l = _project(x_node, wl, bl, tile_m=tile_m, mxu_dtype=mxu_dtype)  # (N, C)
    h_r = _project(x_node, wr, br, tile_m=tile_m, mxu_dtype=mxu_dtype)  # (N, C)
    h_lt = h_l.T                                                        # (C, N)

    grid = (n_pad // tile_m, n_pad // tile_n)
    kernel = functools.partial(_gatv2_attn_kernel, channels=c,
                               neg_slope=NEG_SLOPE, apply_relu=apply_relu,
                               mxu_dtype=mxu_dtype)

    return pl.pallas_call(
        kernel,
        out_shape=jax.ShapeDtypeStruct((n_pad, c), jnp.float32),
        grid_spec=pltpu.PrefetchScalarGridSpec(
            num_scalar_prefetch=1,                 # block-nonzero table (SMEM)
            grid=grid,
            in_specs=[
                pl.BlockSpec((tile_m, c), lambda i, j, blk: (i, 0)),     # h_r
                pl.BlockSpec((c, tile_n), lambda i, j, blk: (0, j)),     # h_l^T
                pl.BlockSpec((tile_n, c), lambda i, j, blk: (j, 0)),     # h_l
                pl.BlockSpec((tile_m, tile_n), lambda i, j, blk: (i, j)),  # adj
                pl.BlockSpec(memory_space=pltpu.MemorySpace.SMEM),       # att
                pl.BlockSpec((1, c), lambda i, j, blk: (0, 0)),          # bias
            ],
            out_specs=pl.BlockSpec((tile_m, c), lambda i, j, blk: (i, 0)),
            scratch_shapes=[
                pltpu.VMEM((tile_m, 1), jnp.float32),   # running max m
                pltpu.VMEM((tile_m, 1), jnp.float32),   # running sum l
                pltpu.VMEM((tile_m, c), jnp.float32),   # running acc
            ],
        ),
        compiler_params=pltpu.CompilerParams(
            dimension_semantics=("parallel", "arbitrary"),
            # actual working set is ~1-2 MiB; keep a comfortable but tight cap
            vmem_limit_bytes=16 * 1024 * 1024,
        ),
    )(blk, h_r, h_lt, h_l, adj, att, bias)


def encoder_forward(x, edge_index, params, *, tile_m=128, tile_n=256,
                    mxu_dtype=jnp.bfloat16):
    """Encoder.forward: relu(GATv2(x)) -> GATv2(.), sliced back to (N, 2*out)."""
    n, _ = x.shape
    out2 = params["wl2"].shape[1]
    assert tile_n % tile_m == 0

    n_pad = _round_up(max(n, tile_n), tile_n)
    x_p = jnp.pad(x, ((0, n_pad - n), (0, 0)))

    adj = build_adj(edge_index, n_pad)                      # (n_pad, n_pad) bf16
    gi, gj = n_pad // tile_m, n_pad // tile_n
    blk = jnp.any(adj.reshape(gi, tile_m, gj, tile_n) != 0,
                  axis=(1, 3)).astype(jnp.int32)            # (gi, gj)

    h1 = _gatv2_layer(x_p, adj, blk,
                      params["wl1"], params["bl1"], params["wr1"],
                      params["br1"], params["att1"].reshape(-1),
                      params["bias1"], apply_relu=True,
                      tile_m=tile_m, tile_n=tile_n, mxu_dtype=mxu_dtype)
    h2 = _gatv2_layer(h1, adj, blk,
                      params["wl2"], params["bl2"], params["wr2"],
                      params["br2"], params["att2"].reshape(-1),
                      params["bias2"], apply_relu=False,
                      tile_m=tile_m, tile_n=tile_n, mxu_dtype=mxu_dtype)
    return h2[:n, :out2]


def init_params(key, in_dim, hidden_dim, out_dim):
    """Deterministic synthetic GATv2 weights (glorot-uniform style)."""
    ks = jax.random.split(key, 12)

    def glorot(k, shape):
        s = jnp.sqrt(6.0 / (shape[0] + shape[1]))
        return jax.random.uniform(k, shape, jnp.float32, -s, s)

    out2 = out_dim * 2
    return {
        # conv1: GATv2Conv(in_dim, hidden_dim, heads=1)
        "wl1": glorot(ks[0], (in_dim, hidden_dim)),
        "wr1": glorot(ks[1], (in_dim, hidden_dim)),
        "bl1": 0.01 * jax.random.normal(ks[2], (1, hidden_dim), jnp.float32),
        "br1": 0.01 * jax.random.normal(ks[3], (1, hidden_dim), jnp.float32),
        "att1": glorot(ks[4], (1, hidden_dim)),
        "bias1": 0.01 * jax.random.normal(ks[5], (1, hidden_dim), jnp.float32),
        # conv2: GATv2Conv(hidden_dim, out_dim * 2, heads=1, concat=False)
        "wl2": glorot(ks[6], (hidden_dim, out2)),
        "wr2": glorot(ks[7], (hidden_dim, out2)),
        "bl2": 0.01 * jax.random.normal(ks[8], (1, out2), jnp.float32),
        "br2": 0.01 * jax.random.normal(ks[9], (1, out2), jnp.float32),
        "att2": glorot(ks[10], (1, out2)),
        "bias2": 0.01 * jax.random.normal(ks[11], (1, out2), jnp.float32),
    }


def encoder_reference(x, edge_index, params):
    """Pure-JAX reference (same math, no Pallas) for a correctness check."""
    adj = build_adj(edge_index, x.shape[0])

    def layer(h, wl, bl, wr, br, att, bias):
        hl = h @ wl + bl
        hr = h @ wr + br
        e = hr[:, None, :] + hl[None, :, :]
        e = jnp.where(e > 0, e, NEG_SLOPE * e)
        logits = jnp.sum(e * att[None, :, :], axis=-1)
        logits = jnp.where(adj > 0, logits, -1e30)
        p = jnp.exp(logits - jnp.max(logits, axis=-1, keepdims=True))
        p = jnp.where(adj > 0, p, 0.0)
        alpha = p / jnp.sum(p, axis=-1, keepdims=True)
        return alpha @ hl + bias

    h1 = jnp.maximum(layer(x, params["wl1"], params["bl1"], params["wr1"],
                           params["br1"], params["att1"], params["bias1"]),
                     0.0)
    return layer(h1, params["wl2"], params["bl2"], params["wr2"],
                 params["br2"], params["att2"], params["bias2"])


if __name__ == "__main__":
    key = jax.random.PRNGKey(0)
    k_x, k_w, k_es, k_ed = jax.random.split(key, 4)

    # Small graph: N nodes, in_dim node features.
    N, IN_DIM, HIDDEN_DIM, OUT_DIM = 16, 32, 32, 8

    x = jax.random.normal(k_x, (N, IN_DIM), jnp.float32)

    # Deterministic edge_index: a ring plus some random edges.
    ring_src = jnp.arange(N, dtype=jnp.int32)
    ring_dst = (ring_src + 1) % N
    rnd_src = jax.random.randint(k_es, (32,), 0, N, dtype=jnp.int32)
    rnd_dst = jax.random.randint(k_ed, (32,), 0, N, dtype=jnp.int32)
    edge_index = jnp.stack([jnp.concatenate([ring_src, rnd_src]),
                            jnp.concatenate([ring_dst, rnd_dst])])  # (2, 48)

    params = init_params(k_w, IN_DIM, HIDDEN_DIM, OUT_DIM)
    ref = encoder_reference(x, edge_index, params)

    # f32 MXU path (tight check; only diff vs reference is blocked-softmax
    # summation order and MXU f32 rounding).
    out = encoder_forward(x, edge_index, params, mxu_dtype=jnp.float32)
    out = jax.block_until_ready(out)
    assert out.shape == (N, OUT_DIM * 2), out.shape
    err = float(jnp.max(jnp.abs(out - ref)))
    assert jnp.allclose(out, ref, atol=2e-2, rtol=2e-2), err

    # default bf16 MXU path (f32 accumulation), looser tolerance.
    out_bf = encoder_forward(x, edge_index, params)
    out_bf = jax.block_until_ready(out_bf)
    assert bool(jnp.all(jnp.isfinite(out_bf))), "bf16 path non-finite"
    err_bf = float(jnp.max(jnp.abs(out_bf - ref)))
    assert jnp.allclose(out_bf, ref, atol=1e-1, rtol=1e-1), err_bf

    print("KERNEL_OK")
</pallas_src>

<mosaic_0001>
module attributes {stable_mosaic.version = 11 : i64} {
  func.func @_proj_kernel(%arg0: i32, %arg1: memref<128x32xf32, #tpu.memory_space<vmem>>, %arg2: memref<32x32xf32, #tpu.memory_space<vmem>>, %arg3: memref<1x32xf32, #tpu.memory_space<vmem>>, %arg4: memref<128x32xf32, #tpu.memory_space<vmem>>) attributes {dimension_semantics = [#tpu.dimension_semantics<parallel>], iteration_bounds = array<i64: 2>, scalar_prefetch = 0 : i64, scratch_operands = 0 : i64, tpu.core_type = #tpu.core_type<tc>, window_params = [{transform_indices = @transform_0, window_bounds = array<i64: 128, 32>}, {pipeline_mode = #tpu.pipeline_mode<synchronous>, transform_indices = @transform_1, window_bounds = array<i64: 32, 32>}, {pipeline_mode = #tpu.pipeline_mode<synchronous>, transform_indices = @transform_2, window_bounds = array<i64: 1, 32>}, {transform_indices = @transform_3, window_bounds = array<i64: 128, 32>}]} {
    %c0 = arith.constant 0 : index
    %c0_0 = arith.constant 0 : index
    %0 = vector.load %arg1[%c0, %c0_0] : memref<128x32xf32, #tpu.memory_space<vmem>>, vector<128x32xf32>
    %c0_1 = arith.constant 0 : index
    %c0_2 = arith.constant 0 : index
    %1 = vector.load %arg2[%c0_1, %c0_2] : memref<32x32xf32, #tpu.memory_space<vmem>>, vector<32x32xf32>
    %cst = arith.constant dense<0.000000e+00> : vector<128x32xf32>
    %2 = tpu.matmul %0, %1, %cst {dimension_numbers = #tpu.dot_dimension_numbers<[1], [0], [0], [1], [0, 0, 1, 1], [], []>} : vector<128x32xf32>, vector<32x32xf32>, vector<128x32xf32> -> vector<128x32xf32>
    %c0_3 = arith.constant 0 : index
    %c0_4 = arith.constant 0 : index
    %3 = vector.load %arg3[%c0_3, %c0_4] : memref<1x32xf32, #tpu.memory_space<vmem>>, vector<1x32xf32>
    %4 = vector.broadcast %3 : vector<1x32xf32> to vector<128x32xf32>
    %5 = arith.addf %2, %4 : vector<128x32xf32>
    %c0_5 = arith.constant 0 : index
    %c0_6 = arith.constant 0 : index
    %6 = vector.load %arg4[%c0_5, %c0_6] : memref<128x32xf32, #tpu.memory_space<vmem>>, vector<128x32xf32>
    tpu.vector_store %arg4[%c0_5, %c0_6], %5 {strides = array<i32>} : memref<128x32xf32, #tpu.memory_space<vmem>>, vector<128x32xf32>,
    return
  }
  func.func @transform_0(%arg0: i32) -> (i32, i32) {
    %c0_i32 = arith.constant 0 : i32
    %c0_i32_0 = arith.constant 0 : i32
    return %arg0, %c0_i32 : i32, i32
  }
  func.func @transform_1(%arg0: i32) -> (i32, i32) {
    %c0_i32 = arith.constant 0 : i32
    %c0_i32_0 = arith.constant 0 : i32
    %c0_i32_1 = arith.constant 0 : i32
    return %c0_i32, %c0_i32_0 : i32, i32
  }
  func.func @transform_2(%arg0: i32) -> (i32, i32) {
    %c0_i32 = arith.constant 0 : i32
    %c0_i32_0 = arith.constant 0 : i32
    %c0_i32_1 = arith.constant 0 : i32
    return %c0_i32, %c0_i32_0 : i32, i32
  }
  func.func @transform_3(%arg0: i32) -> (i32, i32) {
    %c0_i32 = arith.constant 0 : i32
    %c0_i32_0 = arith.constant 0 : i32
    return %arg0, %c0_i32 : i32, i32
  }
}

</mosaic_0001>

<llo_original>
// kernel: tpu_custom_call.1
$region0: #{tpu_custom_call.1}
  #allocation0 [shape = 'u32[]', space=smem, size = 0x4, offset = 0x4, fixed_abs, tag = 'smem constant byte address 0x4 - core index']
  #allocation1 [shape = 'u32[144,128]{1,0:T(1,128)}', space=vmem, size = 0x12000, scoped, tag = 'internal scratch']
  %s0 = inlined_call_operand.vmem [shape: f32[256,32], index: 0, kind: input, shape index: {}]
  %s1 = inlined_call_operand.vmem [shape: f32[32,32], index: 1, kind: input, shape index: {}]
  %s2 = inlined_call_operand.vmem [shape: f32[1,32], index: 2, kind: input, shape index: {}]
  %s3 = inlined_call_operand.vmem [shape: f32[256,32], index: 3, kind: output, shape index: {}]
  %s4 = sld [smem:[#allocation0]]
  $region45: #{tpu_custom_call.1} parent=0
    _
  %s6 = ssub.s32 1, %s4
  %s7 = scalar_select 0, %s6, %s4
  loop: start=0, step=1, limit=4
  $region2: #{tpu_custom_call.1} parent=0 // loop_pre_header
    _
  $region3: #{tpu_custom_call.1} parent=0 // loop_header
    %s9 = sphi 0, %s13
    %p10 = scmp.ge.s32.totalorder %s9, 4
    %s19 = sphi 0, %s21
    %s22 = sphi 0, %s19
    %s23 = sphi 0, %s22
    %s39 = sphi 0, %s23
    %s43 = sphi 0, %s43
    %s45 = sphi 0, %s43
    %s46 = sphi 0, %s45
    %s60 = sphi 0, %s46
    %s64 = sphi 0, %s64
    %s66 = sphi 0, %s64
    %s67 = sphi 0, %s66
    %s81 = sphi 0, %s67
    %s87 = sphi 0, %s89
    %s90 = sphi 0, %s87
    %s91 = sphi 0, %s90
    %s107 = sphi 0, %s91
  $region4: #{tpu_custom_call.1} parent=0 // loop_header_branch
    %12 = sbr.rel (%p10) target = $region8
  $region5: #{tpu_custom_call.1} parent=0 // loop_body
    %s14 = ssub.s32 %s9, 1
    %s15 = ssub.s32 %s9, 2
    %s16 = sadd.s32 %s9, 1
    %s17 = ssub.s32 %s9, %s16
    %p18 = scmp.eq.s32.totalorder %s17, 0
    %s20 = sadd.s32 %s19, 1
    %s21 = scalar_select %p18, %s19, %s20
    %p24 = pneg %p18
    %p25 = scmp.eq.s32.totalorder %s9, 1
    %p26 = por %p24, %p25
    %p27 = scmp.ne.s32.totalorder %s19, %s22
    %p28 = scmp.eq.s32.totalorder %s9, 0
    %p29 = por %p27, %p28
    %p30 = scmp.ne.s32.totalorder %s19, %s22
    %p31 = scmp.eq.s32.totalorder %s14, 1
    %p32 = por %p30, %p31
    %p33 = scmp.ne.s32.totalorder %s22, %s23
    %p34 = scmp.eq.s32.totalorder %s14, 0
    %p35 = por %p33, %p34
    %p36 = scmp.ne.s32.totalorder %s22, %s23
    %p37 = scmp.eq.s32.totalorder %s15, 1
    %p38 = por %p36, %p37
    %p40 = scmp.ne.s32.totalorder %s23, %s39
    %p41 = scmp.eq.s32.totalorder %s15, 0
    %p42 = por %p40, %p41
    %s44 = sadd.s32 %s43, 1
    %p47 = scmp.eq.s32.totalorder %s9, 1
    %p48 = scmp.ne.s32.totalorder %s43, %s45
    %p49 = scmp.eq.s32.totalorder %s9, 0
    %p50 = por %p48, %p49
    %p51 = scmp.ne.s32.totalorder %s43, %s45
    %p52 = scmp.eq.s32.totalorder %s14, 1
    %p53 = por %p51, %p52
    %p54 = scmp.ne.s32.totalorder %s45, %s46
    %p55 = scmp.eq.s32.totalorder %s14, 0
    %p56 = por %p54, %p55
    %p57 = scmp.ne.s32.totalorder %s45, %s46
    %p58 = scmp.eq.s32.totalorder %s15, 1
    %p59 = por %p57, %p58
    %p61 = scmp.ne.s32.totalorder %s46, %s60
    %p62 = scmp.eq.s32.totalorder %s15, 0
    %p63 = por %p61, %p62
    %s65 = sadd.s32 %s64, 1
    %p68 = scmp.eq.s32.totalorder %s9, 1
    %p69 = scmp.ne.s32.totalorder %s64, %s66
    %p70 = scmp.eq.s32.totalorder %s9, 0
    %p71 = por %p69, %p70
    %p72 = scmp.ne.s32.totalorder %s64, %s66
    %p73 = scmp.eq.s32.totalorder %s14, 1
    %p74 = por %p72, %p73
    %p75 = scmp.ne.s32.totalorder %s66, %s67
    %p76 = scmp.eq.s32.totalorder %s14, 0
    %p77 = por %p75, %p76
    %p78 = scmp.ne.s32.totalorder %s66, %s67
    %p79 = scmp.eq.s32.totalorder %s15, 1
    %p80 = por %p78, %p79
    %p82 = scmp.ne.s32.totalorder %s67, %s81
    %p83 = scmp.eq.s32.totalorder %s15, 0
    %p84 = por %p82, %p83
    %s85 = ssub.s32 %s9, %s16
    %p86 = scmp.eq.s32.totalorder %s85, 0
    %s88 = sadd.s32 %s87, 1
    %s89 = scalar_select %p86, %s87, %s88
    %p92 = pneg %p86
    %p93 = scmp.eq.s32.totalorder %s9, 1
    %p94 = por %p92, %p93
    %p95 = scmp.ne.s32.totalorder %s87, %s90
    %p96 = scmp.eq.s32.totalorder %s9, 0
    %p97 = por %p95, %p96
    %p98 = scmp.ne.s32.totalorder %s87, %s90
    %p99 = scmp.eq.s32.totalorder %s14, 1
    %p100 = por %p98, %p99
    %p101 = scmp.ne.s32.totalorder %s90, %s91
    %p102 = scmp.eq.s32.totalorder %s14, 0
    %p103 = por %p101, %p102
    %p104 = scmp.ne.s32.totalorder %s90, %s91
    %p105 = scmp.eq.s32.totalorder %s15, 1
    %p106 = por %p104, %p105
    %p108 = scmp.ne.s32.totalorder %s91, %s107
    %p109 = scmp.eq.s32.totalorder %s15, 0
    %p110 = por %p108, %p109
    %p111 = scmp.le.s32.totalorder 1, %s9
    %p112 = scmp.lt.s32.totalorder %s9, 3
    %p113 = pnand %p111, %p112
    %p114 = pneg %p113
    // Predicated region
    $region9: #{tpu_custom_call.1} parent=5 // pred_check
      _
    $region10: #{tpu_custom_call.1} parent=5 // pred_check_branch
      %116 = sbr.rel (%p113) target = $region12
    $region11: #{tpu_custom_call.1} parent=5 // pred_region
      %s117 = ssub.s32 %s9, 1
      // Predicated region
      $region13: #{tpu_custom_call.1} parent=11 // pred_check
        %p118 = pneg %p56
      $region14: #{tpu_custom_call.1} parent=11 // pred_check_branch
        %120 = sbr.rel (%p118) target = $region16
      $region15: #{tpu_custom_call.1} parent=11 // pred_region
        _
      $region16: #{tpu_custom_call.1} parent=11 // pred_fallthru
        _
      // Predicated region
      $region17: #{tpu_custom_call.1} parent=11 // pred_check
        %p121 = pneg %p77
      $region18: #{tpu_custom_call.1} parent=11 // pred_check_branch
        %123 = sbr.rel (%p121) target = $region20
      $region19: #{tpu_custom_call.1} parent=11 // pred_region
        _
      $region20: #{tpu_custom_call.1} parent=11 // pred_fallthru
        _
    $region12: #{tpu_custom_call.1} parent=5 // pred_fallthru
      _
    %p124 = scmp.lt.s32.totalorder %s9, 2
    // Predicated region
    $region21: #{tpu_custom_call.1} parent=5 // pred_check
      %p125 = pneg %p124
    $region22: #{tpu_custom_call.1} parent=5 // pred_check_branch
      %127 = sbr.rel (%p125) target = $region24
    $region23: #{tpu_custom_call.1} parent=5 // pred_region
      // Predicated region
      $region25: #{tpu_custom_call.1} parent=23 // pred_check
        %p128 = pneg %p29
      $region26: #{tpu_custom_call.1} parent=23 // pred_check_branch
        %130 = sbr.rel (%p128) target = $region28
      $region27: #{tpu_custom_call.1} parent=23 // pred_region
        %s131 = smul.u32 16, %s9
        %p132 = scmp.lt.s32.totalorder %s131, 31
        %s133 = scalar_select %p132, %s131, 31
        %s134 = smul.addr %s133, 8
        %s135 = scalar_lea.vmem %s0, %s134
        %s136 = smul.u32 16, %s9
      $region28: #{tpu_custom_call.1} parent=23 // pred_fallthru
        _
    $region24: #{tpu_custom_call.1} parent=5 // pred_fallthru
      _
    %p137 = scmp.le.s32.totalorder 1, %s9
    %p138 = scmp.lt.s32.totalorder %s9, 3
    %p139 = pnand %p137, %p138
    %p140 = pneg %p139
    // Predicated region
    $region29: #{tpu_custom_call.1} parent=5 // pred_check
      _
    $region30: #{tpu_custom_call.1} parent=5 // pred_check_branch
      %142 = sbr.rel (%p139) target = $region32
    $region31: #{tpu_custom_call.1} parent=5 // pred_region
      %s143 = ssub.s32 %s9, 1
      %s144 = smul.u32 16, %s14
      %p145 = scmp.lt.s32.totalorder %s144, 31
      %s146 = scalar_select %p145, %s144, 31
      %s147 = smul.addr %s146, 8
      %s148 = scalar_lea.vmem %s0, %s147
      %p149 = pneg %p35
      %p150 = pneg %p32
      %p151 = pneg %p56
      %p152 = pneg %p53
      %p153 = pneg %p77
      %p154 = pneg %p74
      %p155 = pneg %p103
      %p156 = pneg %p100
      %s157 = smul.u32 16, %s14
      %p158 = scmp.lt.s32.totalorder %s157, 31
      %s159 = scalar_select %p158, %s157, 31
      %s160 = smul.addr %s159, 8
      %s161 = scalar_lea.vmem %s3, %s160
      %s162 = smul.u32 16, %s14
      %p163 = scmp.lt.s32.totalorder %s162, 31
      %s164 = scalar_select %p163, %s162, 31
      %s165 = smul.addr %s164, 8
      %s166 = scalar_lea.vmem %s0, %s165
      %s167 = smul.u32 16, %s14
      %s168 = smul.u32 16, %s14
      %p169 = scmp.lt.s32.totalorder %s168, 31
      %s170 = scalar_select %p169, %s168, 31
      %s171 = smul.addr %s170, 8
      %s172 = scalar_lea.vmem %s3, %s171
      %s173 = smul.u32 16, %s14
      %v174 = vld [vmem:[%s166] sm:$0xff]
      %v175 = vld [vmem:[%s166 + $0x8] sm:$0xff]
      %v176 = vld [vmem:[%s166 + $0x10] sm:$0xff]
      %v177 = vld [vmem:[%s166 + $0x18] sm:$0xff]
      %v178 = vld [vmem:[%s166 + $0x20] sm:$0xff]
      %v179 = vld [vmem:[%s166 + $0x28] sm:$0xff]
      %v180 = vld [vmem:[%s166 + $0x30] sm:$0xff]
      %v181 = vld [vmem:[%s166 + $0x38] sm:$0xff]
      %v182 = vld [vmem:[%s166 + $0x40] sm:$0xff]
      %v183 = vld [vmem:[%s166 + $0x48] sm:$0xff]
      %v184 = vld [vmem:[%s166 + $0x50] sm:$0xff]
      %v185 = vld [vmem:[%s166 + $0x58] sm:$0xff]
      %v186 = vld [vmem:[%s166 + $0x60] sm:$0xff]
      %v187 = vld [vmem:[%s166 + $0x68] sm:$0xff]
      %v188 = vld [vmem:[%s166 + $0x70] sm:$0xff]
      %v189 = vld [vmem:[%s166 + $0x78] sm:$0xff]
      %v190 = vld [vmem:[%s1] sm:$0xff]
      %v191 = vld [vmem:[%s1 + $0x8] sm:$0xff]
      %v192 = vld [vmem:[%s1 + $0x10] sm:$0xff]
      %v193 = vld [vmem:[%s1 + $0x18] sm:$0xff]
      %v194 = vld [vmem:[%s2] sm:$0x1]
      %v196 = vlaneseq
      %v197 = vshrl.u32 %v196, 7
      %v198 = vsub.s32 0, %v197
      %v199 = vrot.slane %v194, %v198
      %vm201 = vcmask 261120
      %v203 = vsel %vm201, %v174, 0
      %v206 = vsel %vm201, %v175, 0
      %v209 = vsel %vm201, %v176, 0
      %v212 = vsel %vm201, %v177, 0
      %v215 = vsel %vm201, %v178, 0
      %v218 = vsel %vm201, %v179, 0
      %v221 = vsel %vm201, %v180, 0
      %v224 = vsel %vm201, %v181, 0
      %v227 = vsel %vm201, %v182, 0
      %v230 = vsel %vm201, %v183, 0
      %v233 = vsel %vm201, %v184, 0
      %v236 = vsel %vm201, %v185, 0
      %v239 = vsel %vm201, %v186, 0
      %v242 = vsel %vm201, %v187, 0
      %v245 = vsel %vm201, %v188, 0
      %v248 = vsel %vm201, %v189, 0
      %250 = vmatprep.subr.mxu0 0.0
      %251 = vmatpush1.msra.mxu0 %v190
      %252 = vmatprep.subr.mxu0 0.0
      %253 = vmatpush1.msra.mxu0 %v191
      %254 = vmatprep.subr.mxu0 0.0
      %255 = vmatpush1.msra.mxu0 %v192
      %256 = vmatprep.subr.mxu0 0.0
      %257 = vmatpush1.msra.mxu0 %v193
      %258 = vmatprep.subr.mxu0 0.0
      %259 = vmatpush1.msra.mxu0 0.0
      %260 = vmatprep.subr.mxu0 0.0
      %261 = vmatpush1.msra.mxu0 0.0
      %262 = vmatprep.subr.mxu0 0.0
      %263 = vmatpush1.msra.mxu0 0.0
      %264 = vmatprep.subr.mxu0 0.0
      %265 = vmatpush1.msra.mxu0 0.0
      %266 = vmatprep.subr.mxu0 0.0
      %267 = vmatpush1.msra.mxu0 0.0
      %268 = vmatprep.subr.mxu0 0.0
      %269 = vmatpush1.msra.mxu0 0.0
      %270 = vmatprep.subr.mxu0 0.0
      %271 = vmatpush1.msra.mxu0 0.0
      %272 = vmatprep.subr.mxu0 0.0
      %273 = vmatpush1.msra.mxu0 0.0
      %274 = vmatprep.subr.mxu0 0.0
      %275 = vmatpush1.msra.mxu0 0.0
      %276 = vmatprep.subr.mxu0 0.0
      %277 = vmatpush1.msra.mxu0 0.0
      %278 = vmatprep.subr.mxu0 0.0
      %279 = vmatpush1.msra.mxu0 0.0
      %280 = vmatprep.subr.mxu0 0.0
      %281 = vmatpush1.msra.mxu0 0.0
      %282 = vmatprep.subr.mxu0 0.0
      %283 = vmatpush1.msra.mxu0 0.0
      %284 = vmatprep.subr.mxu0 0.0
      %285 = vmatpush1.msra.mxu0 0.0
      %286 = vmatprep.subr.mxu0 0.0
      %287 = vmatpush1.msra.mxu0 0.0
      %288 = vmatprep.subr.mxu0 0.0
      %289 = vmatpush1.msra.mxu0 0.0
      %290 = vmatprep.subr.mxu0 0.0
      %291 = vmatpush1.msra.mxu0 0.0
      %292 = vmatprep.subr.mxu0 0.0
      %293 = vmatpush1.msra.mxu0 0.0
      %294 = vmatprep.subr.mxu0 0.0
      %295 = vmatpush1.msra.mxu0 0.0
      %296 = vmatprep.subr.mxu0 0.0
      %297 = vmatpush1.msra.mxu0 0.0
      %298 = vmatprep.subr.mxu0 0.0
      %299 = vmatpush1.msra.mxu0 0.0
      %300 = vmatprep.subr.mxu0 0.0
      %301 = vmatpush1.msra.mxu0 0.0
      %302 = vmatprep.subr.mxu0 0.0
      %303 = vmatpush1.msra.mxu0 0.0
      %304 = vmatprep.subr.mxu0 0.0
      %305 = vmatpush1.msra.mxu0 0.0
      %306 = vmatprep.subr.mxu0 0.0
      %307 = vmatpush1.msra.mxu0 0.0
      %308 = vmatprep.subr.mxu0 0.0
      %309 = vmatpush1.msra.mxu0 0.0
      %310 = vmatprep.subr.mxu0 0.0
      %311 = vmatpush1.msra.mxu0 0.0
      %312 = vmatprep.subr.mxu0 0.0
      %313 = vmatpush1.msra.mxu0 0.0
      %314 = vmatprep.mubr.f32.mxu0 0.0
      %315 = vmatmul.mubr.f32.gmra.mrb[0].mxu0 %v203
      %v316 = vpop.f32.mrb[0].mxu0
      %v317 = vadd.f32 %v199, %v316
      %v318 = vpop.f32.mrb[0].mxu0
      %319 = vmatprep.mubr.f32.mxu0 0.0
      %320 = vmatmul.mubr.f32.gmra.mrb[0].mxu0 %v206
      %v321 = vpop.f32.mrb[0].mxu0
      %v322 = vadd.f32 %v199, %v321
      %v323 = vpop.f32.mrb[0].mxu0
      %324 = vmatprep.mubr.f32.mxu0 0.0
      %325 = vmatmul.mubr.f32.gmra.mrb[0].mxu0 %v209
      %v326 = vpop.f32.mrb[0].mxu0
      %v327 = vadd.f32 %v199, %v326
      %v328 = vpop.f32.mrb[0].mxu0
      %329 = vmatprep.mubr.f32.mxu0 0.0
      %330 = vmatmul.mubr.f32.gmra.mrb[0].mxu0 %v212
      %v331 = vpop.f32.mrb[0].mxu0
      %v332 = vadd.f32 %v199, %v331
      %v333 = vpop.f32.mrb[0].mxu0
      %334 = vmatprep.mubr.f32.mxu0 0.0
      %335 = vmatmul.mubr.f32.gmra.mrb[0].mxu0 %v215
      %v336 = vpop.f32.mrb[0].mxu0
      %v337 = vadd.f32 %v199, %v336
      %v338 = vpop.f32.mrb[0].mxu0
      %339 = vmatprep.mubr.f32.mxu0 0.0
      %340 = vmatmul.mubr.f32.gmra.mrb[0].mxu0 %v218
      %v341 = vpop.f32.mrb[0].mxu0
      %v342 = vadd.f32 %v199, %v341
      %v343 = vpop.f32.mrb[0].mxu0
      %344 = vmatprep.mubr.f32.mxu0 0.0
      %345 = vmatmul.mubr.f32.gmra.mrb[0].mxu0 %v221
      %v346 = vpop.f32.mrb[0].mxu0
      %v347 = vadd.f32 %v199, %v346
      %v348 = vpop.f32.mrb[0].mxu0
      %349 = vmatprep.mubr.f32.mxu0 0.0
      %350 = vmatmul.mubr.f32.gmra.mrb[0].mxu0 %v224
      %v351 = vpop.f32.mrb[0].mxu0
      %v352 = vadd.f32 %v199, %v351
      %v353 = vpop.f32.mrb[0].mxu0
      %354 = vmatprep.mubr.f32.mxu0 0.0
      %355 = vmatmul.mubr.f32.gmra.mrb[0].mxu0 %v227
      %v356 = vpop.f32.mrb[0].mxu0
      %v357 = vadd.f32 %v199, %v356
      %v358 = vpop.f32.mrb[0].mxu0
      %359 = vmatprep.mubr.f32.mxu0 0.0
      %360 = vmatmul.mubr.f32.gmra.mrb[0].mxu0 %v230
      %v361 = vpop.f32.mrb[0].mxu0
      %v362 = vadd.f32 %v199, %v361
      %v363 = vpop.f32.mrb[0].mxu0
      %364 = vmatprep.mubr.f32.mxu0 0.0
      %365 = vmatmul.mubr.f32.gmra.mrb[0].mxu0 %v233
      %v366 = vpop.f32.mrb[0].mxu0
      %v367 = vadd.f32 %v199, %v366
      %v368 = vpop.f32.mrb[0].mxu0
      %369 = vmatprep.mubr.f32.mxu0 0.0
      %370 = vmatmul.mubr.f32.gmra.mrb[0].mxu0 %v236
      %v371 = vpop.f32.mrb[0].mxu0
      %v372 = vadd.f32 %v199, %v371
      %v373 = vpop.f32.mrb[0].mxu0
      %374 = vmatprep.mubr.f32.mxu0 0.0
      %375 = vmatmul.mubr.f32.gmra.mrb[0].mxu0 %v239
      %v376 = vpop.f32.mrb[0].mxu0
      %v377 = vadd.f32 %v199, %v376
      %v378 = vpop.f32.mrb[0].mxu0
      %379 = vmatprep.mubr.f32.mxu0 0.0
      %380 = vmatmul.mubr.f32.gmra.mrb[0].mxu0 %v242
      %v381 = vpop.f32.mrb[0].mxu0
      %v382 = vadd.f32 %v199, %v381
      %v383 = vpop.f32.mrb[0].mxu0
      %384 = vmatprep.mubr.f32.mxu0 0.0
      %385 = vmatmul.mubr.f32.gmra.mrb[0].mxu0 %v245
      %v386 = vpop.f32.mrb[0].mxu0
      %v387 = vadd.f32 %v199, %v386
      %v388 = vpop.f32.mrb[0].mxu0
      %389 = vmatprep.mubr.f32.mxu0 0.0
      %390 = vmatmul.mubr.f32.gmra.mrb[0].mxu0 %v248
      %v391 = vpop.f32.mrb[0].mxu0
      %v392 = vadd.f32 %v199, %v391
      %v393 = vpop.f32.mrb[0].mxu0
      %394 = vdwg.mxu0
      %395 = vst.msk [vmem:[%s172] sm:$0xff] %vm201, %v317
      %396 = vst.msk [vmem:[%s172 + $0x8] sm:$0xff] %vm201, %v322
      %397 = vst.msk [vmem:[%s172 + $0x10] sm:$0xff] %vm201, %v327
      %398 = vst.msk [vmem:[%s172 + $0x18] sm:$0xff] %vm201, %v332
      %399 = vst.msk [vmem:[%s172 + $0x20] sm:$0xff] %vm201, %v337
      %400 = vst.msk [vmem:[%s172 + $0x28] sm:$0xff] %vm201, %v342
      %401 = vst.msk [vmem:[%s172 + $0x30] sm:$0xff] %vm201, %v347
      %402 = vst.msk [vmem:[%s172 + $0x38] sm:$0xff] %vm201, %v352
      %403 = vst.msk [vmem:[%s172 + $0x40] sm:$0xff] %vm201, %v357
      %404 = vst.msk [vmem:[%s172 + $0x48] sm:$0xff] %vm201, %v362
      %405 = vst.msk [vmem:[%s172 + $0x50] sm:$0xff] %vm201, %v367
      %406 = vst.msk [vmem:[%s172 + $0x58] sm:$0xff] %vm201, %v372
      %407 = vst.msk [vmem:[%s172 + $0x60] sm:$0xff] %vm201, %v377
      %408 = vst.msk [vmem:[%s172 + $0x68] sm:$0xff] %vm201, %v382
      %409 = vst.msk [vmem:[%s172 + $0x70] sm:$0xff] %vm201, %v387
      %410 = vst.msk [vmem:[%s172 + $0x78] sm:$0xff] %vm201, %v392
      %s411 = smul.u32 16, %s14
      %p412 = scmp.lt.s32.totalorder %s411, 31
      %s413 = scalar_select %p412, %s411, 31
      %s414 = smul.addr %s413, 8
      %s415 = scalar_lea.vmem %s3, %s414
      // Predicated region
      $region33: #{tpu_custom_call.1} parent=31 // pred_check
        %p416 = pneg %p100
      $region34: #{tpu_custom_call.1} parent=31 // pred_check_branch
        %418 = sbr.rel (%p416) target = $region36
      $region35: #{tpu_custom_call.1} parent=31 // pred_region
        %s419 = smul.u32 16, %s14
      $region36: #{tpu_custom_call.1} parent=31 // pred_fallthru
        _
    $region32: #{tpu_custom_call.1} parent=5 // pred_fallthru
      _
    %p420 = scmp.le.s32.totalorder 2, %s9
    // Predicated region
    $region37: #{tpu_custom_call.1} parent=5 // pred_check
      %p421 = pneg %p420
    $region38: #{tpu_custom_call.1} parent=5 // pred_check_branch
      %423 = sbr.rel (%p421) target = $region40
    $region39: #{tpu_custom_call.1} parent=5 // pred_region
      %s424 = ssub.s32 %s9, 2
      // Predicated region
      $region41: #{tpu_custom_call.1} parent=39 // pred_check
        %p425 = pneg %p106
      $region42: #{tpu_custom_call.1} parent=39 // pred_check_branch
        %427 = sbr.rel (%p425) target = $region44
      $region43: #{tpu_custom_call.1} parent=39 // pred_region
        %s428 = smul.u32 16, %s15
        %p429 = scmp.lt.s32.totalorder %s428, 31
        %s430 = scalar_select %p429, %s428, 31
        %s431 = smul.addr %s430, 8
        %s432 = scalar_lea.vmem %s3, %s431
      $region44: #{tpu_custom_call.1} parent=39 // pred_fallthru
        _
    $region40: #{tpu_custom_call.1} parent=5 // pred_fallthru
      _
  $region6: #{tpu_custom_call.1} parent=0 // loop_footer
    %s13 = sadd.s32 1, %s9
  $region7: #{tpu_custom_call.1} parent=0 // loop_footer_branch
    %8 = sbr.rel target = $region3
  $region8: #{tpu_custom_call.1} parent=0 // loop_exit
    _

</llo_original>
